<compile_context>
chip_gen: v7x
topology: tpu7x:2x2x1
jax: 0.10.0
libtpu: 0.0.40
codegen_flags: <defaults>
</compile_context>

<pallas_src>
import functools

import jax
import jax.numpy as jnp
from jax.experimental import pallas as pl
from jax.experimental.pallas import tpu as pltpu

LANE = 128     # TPU lane width
SUBLANE = 8    # TPU sublane width


def _round_up(x, m):
    return (x + m - 1) // m * m


# --------------------------------------------------------------------------
# Embedding layer (glue).
# TODO(synk): AutoEncoderEmbedding source is not provided; approximated as
#             one_hot(component, C) ++ one_hot(level, L) ++ scalar value,
#             giving the documented per-timestep width C + L + 1.
# --------------------------------------------------------------------------
def autoencoder_embedding(input_dict, num_components, num_levels):
    comp = input_dict["component"]          # (B, W) int32
    level = input_dict["level"]             # (B, W) int32
    value = input_dict["value"]             # (B, W) float32
    comp_oh = jax.nn.one_hot(comp, num_components, dtype=jnp.float32)
    level_oh = jax.nn.one_hot(level, num_levels, dtype=jnp.float32)
    emb = jnp.concatenate([comp_oh, level_oh, value[..., None]], axis=-1)
    return emb                              # (B, W, C + L + 1)


# --------------------------------------------------------------------------
# Fused VAE kernel: everything after the flatten, on one padded batch tile.
# --------------------------------------------------------------------------
def vae_kernel(emb_ref, eps_ref,
               w1_ref, b1_ref, whead_ref, bhead_ref,
               w3_ref, b3_ref, w4_ref, b4_ref,
               recon_ref, mu_ref, logvar_ref,
               *, latent_pad):
    x = emb_ref[...]                                                    # (TB, Dp)

    # encode: h1 = relu(x @ W1 + b1)
    h1 = jnp.dot(x, w1_ref[...], preferred_element_type=jnp.float32) + b1_ref[...]
    h1 = jnp.maximum(h1, 0.0)                                           # (TB, Hp)

    # fused fc21|fc22 head: one matmul, split with static 128-aligned slices.
    head = jnp.dot(h1, whead_ref[...],
                   preferred_element_type=jnp.float32) + bhead_ref[...]  # (TB, 2*Lp)
    mu = head[:, :latent_pad]
    logvar = head[:, latent_pad:]

    # reparametrize: z = eps * exp(0.5 * logvar) + mu
    std = jnp.exp(0.5 * logvar)
    z = eps_ref[...] * std + mu                                         # (TB, Lp)

    # decode: sigmoid(relu(z @ W3 + b3) @ W4 + b4)
    h3 = jnp.dot(z, w3_ref[...], preferred_element_type=jnp.float32) + b3_ref[...]
    h3 = jnp.maximum(h3, 0.0)                                           # (TB, Hp)
    logits = jnp.dot(h3, w4_ref[...], preferred_element_type=jnp.float32) + b4_ref[...]

    recon_ref[...] = jax.nn.sigmoid(logits)
    mu_ref[...] = mu
    logvar_ref[...] = logvar


# --------------------------------------------------------------------------
# Wrapper: pad batch + features to tile-friendly shapes, launch over a
# parallel batch grid, slice padding off.
# --------------------------------------------------------------------------
def vae_forward(padded_params, input_dict, eps, *,
                num_components, num_levels, window_size,
                latent_dim=10, batch_tile=512):
    """Returns (embedding, reconstruction, mu, logvar) — same as PyTorch forward."""
    emb_mat = autoencoder_embedding(input_dict, num_components, num_levels)
    B = emb_mat.shape[0]
    d_in = window_size * (num_components + num_levels + 1)
    embedding = emb_mat.reshape(B, d_in)                                # view(B, -1)

    d_pad = padded_params["w1"].shape[0]
    h_pad = padded_params["w1"].shape[1]
    l_pad = padded_params["w3"].shape[0]

    # Batch tile: multiple of 8 (sublane), capped so double buffers + weights
    # stay well under v7x's 64 MiB VMEM.
    tb = min(batch_tile, _round_up(B, SUBLANE))
    b_pad = _round_up(B, tb)
    grid = (b_pad // tb,)

    x_pad = jnp.zeros((b_pad, d_pad), jnp.float32).at[:B, :d_in].set(embedding)
    eps_pad = jnp.zeros((b_pad, l_pad), jnp.float32).at[:B, :latent_dim].set(eps)

    row = lambda i: (i, 0)      # batch-tiled operands
    rep = lambda i: (0, 0)      # VMEM-resident weights / biases

    in_specs = [
        pl.BlockSpec((tb, d_pad), row),            # embedding tile
        pl.BlockSpec((tb, l_pad), row),            # eps tile
        pl.BlockSpec((d_pad, h_pad), rep),         # w1
        pl.BlockSpec((1, h_pad), rep),             # b1
        pl.BlockSpec((h_pad, 2 * l_pad), rep),     # w_head (w21|w22)
        pl.BlockSpec((1, 2 * l_pad), rep),         # b_head
        pl.BlockSpec((l_pad, h_pad), rep),         # w3
        pl.BlockSpec((1, h_pad), rep),             # b3
        pl.BlockSpec((h_pad, d_pad), rep),         # w4
        pl.BlockSpec((1, d_pad), rep),             # b4
    ]
    out_specs = (
        pl.BlockSpec((tb, d_pad), row),            # recon
        pl.BlockSpec((tb, l_pad), row),            # mu
        pl.BlockSpec((tb, l_pad), row),            # logvar
    )
    out_shape = (
        jax.ShapeDtypeStruct((b_pad, d_pad), jnp.float32),
        jax.ShapeDtypeStruct((b_pad, l_pad), jnp.float32),
        jax.ShapeDtypeStruct((b_pad, l_pad), jnp.float32),
    )

    kernel = functools.partial(vae_kernel, latent_pad=l_pad)
    recon_p, mu_p, logvar_p = pl.pallas_call(
        kernel,
        grid=grid,
        in_specs=in_specs,
        out_specs=out_specs,
        out_shape=out_shape,
        compiler_params=pltpu.CompilerParams(
            dimension_semantics=("parallel",)),
    )(x_pad, eps_pad,
      padded_params["w1"], padded_params["b1"],
      padded_params["w_head"], padded_params["b_head"],
      padded_params["w3"], padded_params["b3"],
      padded_params["w4"], padded_params["b4"])

    recon = recon_p[:B, :d_in]
    mu = mu_p[:B, :latent_dim]
    logvar = logvar_p[:B, :latent_dim]
    return embedding, recon, mu, logvar


# --------------------------------------------------------------------------
# Parameters: PyTorch Linear semantics (W is (out, in)); we store the
# transpose (in, out) so the kernel does x @ W directly.
# --------------------------------------------------------------------------
def init_params(key, d_in, hidden=100, latent=10):
    def linear(k, fan_in, fan_out):
        kw, kb = jax.random.split(k)
        bound = 1.0 / jnp.sqrt(fan_in)
        w = jax.random.uniform(kw, (fan_in, fan_out), jnp.float32, -bound, bound)
        b = jax.random.uniform(kb, (1, fan_out), jnp.float32, -bound, bound)
        return w, b

    ks = jax.random.split(key, 5)
    w1, b1 = linear(ks[0], d_in, hidden)      # fc1
    w21, b21 = linear(ks[1], hidden, latent)  # fc21
    w22, b22 = linear(ks[2], hidden, latent)  # fc22
    w3, b3 = linear(ks[3], latent, hidden)    # fc3
    w4, b4 = linear(ks[4], hidden, d_in)      # fc4
    return dict(w1=w1, b1=b1, w21=w21, b21=b21, w22=w22, b22=b22,
                w3=w3, b3=b3, w4=w4, b4=b4)


def pad_and_fuse_params(params, d_in, hidden=100, latent=10):
    """Zero-pad all feature dims to multiples of 128 and fuse fc21|fc22."""
    d_pad = _round_up(d_in, LANE)
    h_pad = _round_up(hidden, LANE)
    l_pad = _round_up(latent, LANE)

    def pad2(w, r, c):
        return jnp.zeros((r, c), jnp.float32).at[:w.shape[0], :w.shape[1]].set(w)

    w1 = pad2(params["w1"], d_pad, h_pad)
    b1 = pad2(params["b1"], 1, h_pad)
    w_head = jnp.concatenate([pad2(params["w21"], h_pad, l_pad),
                              pad2(params["w22"], h_pad, l_pad)], axis=1)
    b_head = jnp.concatenate([pad2(params["b21"], 1, l_pad),
                              pad2(params["b22"], 1, l_pad)], axis=1)
    w3 = pad2(params["w3"], l_pad, h_pad)
    b3 = pad2(params["b3"], 1, h_pad)
    w4 = pad2(params["w4"], h_pad, d_pad)
    b4 = pad2(params["b4"], 1, d_pad)
    return dict(w1=w1, b1=b1, w_head=w_head, b_head=b_head,
                w3=w3, b3=b3, w4=w4, b4=b4)


def vae_reference(params, embedding, eps):
    """Pure-JAX reference of the PyTorch forward (post-embedding)."""
    h1 = jnp.maximum(embedding @ params["w1"] + params["b1"], 0.0)
    mu = h1 @ params["w21"] + params["b21"]
    logvar = h1 @ params["w22"] + params["b22"]
    z = eps * jnp.exp(0.5 * logvar) + mu
    h3 = jnp.maximum(z @ params["w3"] + params["b3"], 0.0)
    recon = jax.nn.sigmoid(h3 @ params["w4"] + params["b4"])
    return recon, mu, logvar


if __name__ == "__main__":
    num_components = 4
    num_levels = 3
    window_size = 8
    batch = 8                                                # one sublane tile
    d_in = window_size * (num_components + num_levels + 1)   # 64

    key = jax.random.PRNGKey(0)
    k_param, k_comp, k_lvl, k_val, k_eps = jax.random.split(key, 5)

    params = init_params(k_param, d_in)
    padded_params = jax.tree.map(jax.device_put, pad_and_fuse_params(params, d_in))

    input_dict = {
        "component": jax.random.randint(k_comp, (batch, window_size), 0, num_components),
        "level": jax.random.randint(k_lvl, (batch, window_size), 0, num_levels),
        "value": jax.random.uniform(k_val, (batch, window_size), jnp.float32),
    }
    # Reparametrization noise (PyTorch draws fresh standard normal each forward).
    eps = jax.random.normal(k_eps, (batch, 10), jnp.float32)

    fwd = jax.jit(functools.partial(
        vae_forward,
        num_components=num_components,
        num_levels=num_levels,
        window_size=window_size,
    ))

    embedding, recon, mu, logvar = fwd(padded_params, input_dict, eps)
    jax.block_until_ready((embedding, recon, mu, logvar))

    assert embedding.shape == (batch, d_in)
    assert recon.shape == (batch, d_in)
    assert mu.shape == (batch, 10)
    assert logvar.shape == (batch, 10)

    # Correctness vs. pure-JAX reference (loose tolerance: TPU MXU f32 path).
    recon_r, mu_r, logvar_r = vae_reference(params, embedding, eps)
    assert jnp.allclose(recon, recon_r, atol=2e-2, rtol=2e-2)
    assert jnp.allclose(mu, mu_r, atol=2e-2, rtol=2e-2)
    assert jnp.allclose(logvar, logvar_r, atol=2e-2, rtol=2e-2)

    print("KERNEL_OK")
</pallas_src>

<mosaic_0001>
module attributes {stable_mosaic.version = 11 : i64} {
  func.func @vae_kernel(%arg0: i32, %arg1: memref<8x128xf32, #tpu.memory_space<vmem>>, %arg2: memref<8x128xf32, #tpu.memory_space<vmem>>, %arg3: memref<128x128xf32, #tpu.memory_space<vmem>>, %arg4: memref<1x128xf32, #tpu.memory_space<vmem>>, %arg5: memref<128x256xf32, #tpu.memory_space<vmem>>, %arg6: memref<1x256xf32, #tpu.memory_space<vmem>>, %arg7: memref<128x128xf32, #tpu.memory_space<vmem>>, %arg8: memref<1x128xf32, #tpu.memory_space<vmem>>, %arg9: memref<128x128xf32, #tpu.memory_space<vmem>>, %arg10: memref<1x128xf32, #tpu.memory_space<vmem>>, %arg11: memref<8x128xf32, #tpu.memory_space<vmem>>, %arg12: memref<8x128xf32, #tpu.memory_space<vmem>>, %arg13: memref<8x128xf32, #tpu.memory_space<vmem>>) attributes {dimension_semantics = [#tpu.dimension_semantics<parallel>], iteration_bounds = array<i64: 1>, scalar_prefetch = 0 : i64, scratch_operands = 0 : i64, tpu.core_type = #tpu.core_type<tc>, window_params = [{transform_indices = @transform_0, window_bounds = array<i64: 8, 128>}, {transform_indices = @transform_1, window_bounds = array<i64: 8, 128>}, {pipeline_mode = #tpu.pipeline_mode<synchronous>, transform_indices = @transform_2, window_bounds = array<i64: 128, 128>}, {pipeline_mode = #tpu.pipeline_mode<synchronous>, transform_indices = @transform_3, window_bounds = array<i64: 1, 128>}, {pipeline_mode = #tpu.pipeline_mode<synchronous>, transform_indices = @transform_4, window_bounds = array<i64: 128, 256>}, {pipeline_mode = #tpu.pipeline_mode<synchronous>, transform_indices = @transform_5, window_bounds = array<i64: 1, 256>}, {pipeline_mode = #tpu.pipeline_mode<synchronous>, transform_indices = @transform_6, window_bounds = array<i64: 128, 128>}, {pipeline_mode = #tpu.pipeline_mode<synchronous>, transform_indices = @transform_7, window_bounds = array<i64: 1, 128>}, {pipeline_mode = #tpu.pipeline_mode<synchronous>, transform_indices = @transform_8, window_bounds = array<i64: 128, 128>}, {pipeline_mode = #tpu.pipeline_mode<synchronous>, transform_indices = @transform_9, window_bounds = array<i64: 1, 128>}, {transform_indices = @transform_10, window_bounds = array<i64: 8, 128>}, {transform_indices = @transform_11, window_bounds = array<i64: 8, 128>}, {transform_indices = @transform_12, window_bounds = array<i64: 8, 128>}]} {
    %c0 = arith.constant 0 : index
    %c0_0 = arith.constant 0 : index
    %0 = vector.load %arg1[%c0, %c0_0] : memref<8x128xf32, #tpu.memory_space<vmem>>, vector<8x128xf32>
    %c0_1 = arith.constant 0 : index
    %c0_2 = arith.constant 0 : index
    %1 = vector.load %arg3[%c0_1, %c0_2] : memref<128x128xf32, #tpu.memory_space<vmem>>, vector<128x128xf32>
    %cst = arith.constant dense<0.000000e+00> : vector<8x128xf32>
    %2 = tpu.matmul %0, %1, %cst {dimension_numbers = #tpu.dot_dimension_numbers<[1], [0], [0], [1], [0, 0, 1, 1], [], []>} : vector<8x128xf32>, vector<128x128xf32>, vector<8x128xf32> -> vector<8x128xf32>
    %c0_3 = arith.constant 0 : index
    %c0_4 = arith.constant 0 : index
    %3 = vector.load %arg4[%c0_3, %c0_4] : memref<1x128xf32, #tpu.memory_space<vmem>>, vector<1x128xf32>
    %4 = vector.broadcast %3 : vector<1x128xf32> to vector<8x128xf32>
    %5 = arith.addf %2, %4 : vector<8x128xf32>
    %cst_5 = arith.constant 0.000000e+00 : f32
    %6 = vector.broadcast %cst_5 : f32 to vector<8x128xf32>
    %7 = arith.maximumf %5, %6 : vector<8x128xf32>
    %c0_6 = arith.constant 0 : index
    %c0_7 = arith.constant 0 : index
    %8 = vector.load %arg5[%c0_6, %c0_7] : memref<128x256xf32, #tpu.memory_space<vmem>>, vector<128x256xf32>
    %cst_8 = arith.constant dense<0.000000e+00> : vector<8x256xf32>
    %9 = tpu.matmul %7, %8, %cst_8 {dimension_numbers = #tpu.dot_dimension_numbers<[1], [0], [0], [1], [0, 0, 1, 1], [], []>} : vector<8x128xf32>, vector<128x256xf32>, vector<8x256xf32> -> vector<8x256xf32>
    %c0_9 = arith.constant 0 : index
    %c0_10 = arith.constant 0 : index
    %10 = vector.load %arg6[%c0_9, %c0_10] : memref<1x256xf32, #tpu.memory_space<vmem>>, vector<1x256xf32>
    %11 = vector.broadcast %10 : vector<1x256xf32> to vector<8x256xf32>
    %12 = arith.addf %9, %11 : vector<8x256xf32>
    %13 = vector.extract_strided_slice %12 {offsets = [0, 0], sizes = [8, 128], strides = [1, 1]} : vector<8x256xf32> to vector<8x128xf32>
    %14 = vector.extract_strided_slice %12 {offsets = [0, 128], sizes = [8, 128], strides = [1, 1]} : vector<8x256xf32> to vector<8x128xf32>
    %cst_11 = arith.constant 5.000000e-01 : f32
    %15 = vector.broadcast %cst_11 : f32 to vector<8x128xf32>
    %16 = arith.mulf %15, %14 : vector<8x128xf32>
    %17 = math.exp %16 : vector<8x128xf32>
    %c0_12 = arith.constant 0 : index
    %c0_13 = arith.constant 0 : index
    %18 = vector.load %arg2[%c0_12, %c0_13] : memref<8x128xf32, #tpu.memory_space<vmem>>, vector<8x128xf32>
    %19 = arith.mulf %18, %17 : vector<8x128xf32>
    %20 = arith.addf %19, %13 : vector<8x128xf32>
    %c0_14 = arith.constant 0 : index
    %c0_15 = arith.constant 0 : index
    %21 = vector.load %arg7[%c0_14, %c0_15] : memref<128x128xf32, #tpu.memory_space<vmem>>, vector<128x128xf32>
    %cst_16 = arith.constant dense<0.000000e+00> : vector<8x128xf32>
    %22 = tpu.matmul %20, %21, %cst_16 {dimension_numbers = #tpu.dot_dimension_numbers<[1], [0], [0], [1], [0, 0, 1, 1], [], []>} : vector<8x128xf32>, vector<128x128xf32>, vector<8x128xf32> -> vector<8x128xf32>
    %c0_17 = arith.constant 0 : index
    %c0_18 = arith.constant 0 : index
    %23 = vector.load %arg8[%c0_17, %c0_18] : memref<1x128xf32, #tpu.memory_space<vmem>>, vector<1x128xf32>
    %24 = vector.broadcast %23 : vector<1x128xf32> to vector<8x128xf32>
    %25 = arith.addf %22, %24 : vector<8x128xf32>
    %cst_19 = arith.constant 0.000000e+00 : f32
    %26 = vector.broadcast %cst_19 : f32 to vector<8x128xf32>
    %27 = arith.maximumf %25, %26 : vector<8x128xf32>
    %c0_20 = arith.constant 0 : index
    %c0_21 = arith.constant 0 : index
    %28 = vector.load %arg9[%c0_20, %c0_21] : memref<128x128xf32, #tpu.memory_space<vmem>>, vector<128x128xf32>
    %cst_22 = arith.constant dense<0.000000e+00> : vector<8x128xf32>
    %29 = tpu.matmul %27, %28, %cst_22 {dimension_numbers = #tpu.dot_dimension_numbers<[1], [0], [0], [1], [0, 0, 1, 1], [], []>} : vector<8x128xf32>, vector<128x128xf32>, vector<8x128xf32> -> vector<8x128xf32>
    %c0_23 = arith.constant 0 : index
    %c0_24 = arith.constant 0 : index
    %30 = vector.load %arg10[%c0_23, %c0_24] : memref<1x128xf32, #tpu.memory_space<vmem>>, vector<1x128xf32>
    %31 = vector.broadcast %30 : vector<1x128xf32> to vector<8x128xf32>
    %32 = arith.addf %29, %31 : vector<8x128xf32>
    %33 = arith.negf %32 : vector<8x128xf32>
    %34 = math.exp %33 : vector<8x128xf32>
    %cst_25 = arith.constant 1.000000e+00 : f32
    %35 = vector.broadcast %cst_25 : f32 to vector<8x128xf32>
    %36 = arith.addf %35, %34 : vector<8x128xf32>
    %37 = arith.divf %35, %36 : vector<8x128xf32>
    %c0_26 = arith.constant 0 : index
    %c0_27 = arith.constant 0 : index
    %38 = vector.load %arg11[%c0_26, %c0_27] : memref<8x128xf32, #tpu.memory_space<vmem>>, vector<8x128xf32>
    tpu.vector_store %arg11[%c0_26, %c0_27], %37 {strides = array<i32>} : memref<8x128xf32, #tpu.memory_space<vmem>>, vector<8x128xf32>,
    %c0_28 = arith.constant 0 : index
    %c0_29 = arith.constant 0 : index
    %39 = vector.load %arg12[%c0_28, %c0_29] : memref<8x128xf32, #tpu.memory_space<vmem>>, vector<8x128xf32>
    tpu.vector_store %arg12[%c0_28, %c0_29], %13 {strides = array<i32>} : memref<8x128xf32, #tpu.memory_space<vmem>>, vector<8x128xf32>,
    %c0_30 = arith.constant 0 : index
    %c0_31 = arith.constant 0 : index
    %40 = vector.load %arg13[%c0_30, %c0_31] : memref<8x128xf32, #tpu.memory_space<vmem>>, vector<8x128xf32>
    tpu.vector_store %arg13[%c0_30, %c0_31], %14 {strides = array<i32>} : memref<8x128xf32, #tpu.memory_space<vmem>>, vector<8x128xf32>,
    return
  }
  func.func @transform_0(%arg0: i32) -> (i32, i32) {
    %c0_i32 = arith.constant 0 : i32
    %c0_i32_0 = arith.constant 0 : i32
    return %arg0, %c0_i32 : i32, i32
  }
  func.func @transform_1(%arg0: i32) -> (i32, i32) {
    %c0_i32 = arith.constant 0 : i32
    %c0_i32_0 = arith.constant 0 : i32
    return %arg0, %c0_i32 : i32, i32
  }
  func.func @transform_2(%arg0: i32) -> (i32, i32) {
    %c0_i32 = arith.constant 0 : i32
    %c0_i32_0 = arith.constant 0 : i32
    %c0_i32_1 = arith.constant 0 : i32
    return %c0_i32, %c0_i32_0 : i32, i32
  }
  func.func @transform_3(%arg0: i32) -> (i32, i32) {
    %c0_i32 = arith.constant 0 : i32
    %c0_i32_0 = arith.constant 0 : i32
    %c0_i32_1 = arith.constant 0 : i32
    return %c0_i32, %c0_i32_0 : i32, i32
  }
  func.func @transform_4(%arg0: i32) -> (i32, i32) {
    %c0_i32 = arith.constant 0 : i32
    %c0_i32_0 = arith.constant 0 : i32
    %c0_i32_1 = arith.constant 0 : i32
    return %c0_i32, %c0_i32_0 : i32, i32
  }
  func.func @transform_5(%arg0: i32) -> (i32, i32) {
    %c0_i32 = arith.constant 0 : i32
    %c0_i32_0 = arith.constant 0 : i32
    %c0_i32_1 = arith.constant 0 : i32
    return %c0_i32, %c0_i32_0 : i32, i32
  }
  func.func @transform_6(%arg0: i32) -> (i32, i32) {
    %c0_i32 = arith.constant 0 : i32
    %c0_i32_0 = arith.constant 0 : i32
    %c0_i32_1 = arith.constant 0 : i32
    return %c0_i32, %c0_i32_0 : i32, i32
  }
  func.func @transform_7(%arg0: i32) -> (i32, i32) {
    %c0_i32 = arith.constant 0 : i32
    %c0_i32_0 = arith.constant 0 : i32
    %c0_i32_1 = arith.constant 0 : i32
    return %c0_i32, %c0_i32_0 : i32, i32
  }
  func.func @transform_8(%arg0: i32) -> (i32, i32) {
    %c0_i32 = arith.constant 0 : i32
    %c0_i32_0 = arith.constant 0 : i32
    %c0_i32_1 = arith.constant 0 : i32
    return %c0_i32, %c0_i32_0 : i32, i32
  }
  func.func @transform_9(%arg0: i32) -> (i32, i32) {
    %c0_i32 = arith.constant 0 : i32
    %c0_i32_0 = arith.constant 0 : i32
    %c0_i32_1 = arith.constant 0 : i32
    return %c0_i32, %c0_i32_0 : i32, i32
  }
  func.func @transform_10(%arg0: i32) -> (i32, i32) {
    %c0_i32 = arith.constant 0 : i32
    %c0_i32_0 = arith.constant 0 : i32
    return %arg0, %c0_i32 : i32, i32
  }
  func.func @transform_11(%arg0: i32) -> (i32, i32) {
    %c0_i32 = arith.constant 0 : i32
    %c0_i32_0 = arith.constant 0 : i32
    return %arg0, %c0_i32 : i32, i32
  }
  func.func @transform_12(%arg0: i32) -> (i32, i32) {
    %c0_i32 = arith.constant 0 : i32
    %c0_i32_0 = arith.constant 0 : i32
    return %arg0, %c0_i32 : i32, i32
  }
}

</mosaic_0001>

<llo_original>
// kernel: vae_forward.1
$region0: #{vae_forward.1}
  #allocation0 [shape = 'u32[]', space=smem, size = 0x4, offset = 0x4, fixed_abs, tag = 'smem constant byte address 0x4 - core index']
  #allocation1 [shape = 'u32[144,128]{1,0:T(1,128)}', space=vmem, size = 0x12000, scoped, tag = 'internal scratch']
  %s0 = inlined_call_operand.vmem [shape: f32[8,128], index: 0, kind: input, shape index: {}]
  %s1 = inlined_call_operand.vmem [shape: f32[8,128], index: 1, kind: input, shape index: {}]
  %s2 = inlined_call_operand.vmem [shape: f32[128,128], index: 2, kind: input, shape index: {}]
  %s3 = inlined_call_operand.vmem [shape: f32[1,128], index: 3, kind: input, shape index: {}]
  %s4 = inlined_call_operand.vmem [shape: f32[128,256], index: 4, kind: input, shape index: {}]
  %s5 = inlined_call_operand.vmem [shape: f32[1,256], index: 5, kind: input, shape index: {}]
  %s6 = inlined_call_operand.vmem [shape: f32[128,128], index: 6, kind: input, shape index: {}]
  %s7 = inlined_call_operand.vmem [shape: f32[1,128], index: 7, kind: input, shape index: {}]
  %s8 = inlined_call_operand.hbm [shape: f32[128,128], index: 8, kind: input, shape index: {}]
  %s9 = inlined_call_operand.vmem [shape: f32[1,128], index: 9, kind: input, shape index: {}]
  %s10 = inlined_call_operand.hbm [shape: f32[8,128], index: 10, kind: output, shape index: {0}]
  %s11 = inlined_call_operand.hbm [shape: f32[8,128], index: 11, kind: output, shape index: {1}]
  %s12 = inlined_call_operand.hbm [shape: f32[8,128], index: 12, kind: output, shape index: {2}]
  %13 = xla_tuple %s10, %s11, %s12
  %s14 = sld [smem:[#allocation0]]
  $region70: #{vae_forward.1} parent=0
    _
  %s16 = ssub.s32 1, %s14
  %s17 = scalar_select 0, %s16, %s14
  $region1: #{vae_forward.1} parent=0
    #allocation2 [shape = 'u8[65536]{0}', space=vmem, size = 0x10000, scoped, tag = 'input window, operand 8, single buffered']
    #allocation3 [shape = 's32[1]{0}', space=sflag, size = 0x4, scoped, tag = 'scoped memory for vae_forward.1']
    #allocation4 [shape = 's32[1]{0}', space=sflag, size = 0x4, scoped, tag = 'scoped memory for vae_forward.1']
    #allocation5 [shape = 'u8[4096]{0}', space=vmem, size = 0x1000, scoped, tag = 'output window, operand 0, single buffered']
    #allocation6 [shape = 'u8[4096]{0}', space=vmem, size = 0x1000, scoped, tag = 'output window, operand 1, single buffered']
    #allocation7 [shape = 's32[1]{0}', space=sflag, size = 0x4, scoped, tag = 'scoped memory for vae_forward.1']
    #allocation8 [shape = 'u8[4096]{0}', space=vmem, size = 0x1000, scoped, tag = 'output window, operand 2, single buffered']
    %18 = vsyncpa [#allocation3], 0
    %19 = vsyncpa [#allocation4], 0
    %20 = vsyncpa [#allocation7], 0
    // Predicated region
    $region2: #{vae_forward.1} parent=1 // pred_check
      _
    $region3: #{vae_forward.1} parent=1 // pred_check_branch
      %22 = sbr.rel (0) target = $region5
    $region4: #{vae_forward.1} parent=1 // pred_region
      _
    $region5: #{vae_forward.1} parent=1 // pred_fallthru
      _
    // Predicated region
    $region6: #{vae_forward.1} parent=1 // pred_check
      _
    $region7: #{vae_forward.1} parent=1 // pred_check_branch
      %24 = sbr.rel (0) target = $region9
    $region8: #{vae_forward.1} parent=1 // pred_region
      _
    $region9: #{vae_forward.1} parent=1 // pred_fallthru
      _
    // Predicated region
    $region10: #{vae_forward.1} parent=1 // pred_check
      _
    $region11: #{vae_forward.1} parent=1 // pred_check_branch
      %26 = sbr.rel (0) target = $region13
    $region12: #{vae_forward.1} parent=1 // pred_region
      _
    $region13: #{vae_forward.1} parent=1 // pred_fallthru
      _
    // Predicated region
    $region14: #{vae_forward.1} parent=1 // pred_check
      _
    $region15: #{vae_forward.1} parent=1 // pred_check_branch
      %28 = sbr.rel (0) target = $region17
    $region16: #{vae_forward.1} parent=1 // pred_region
      _
    $region17: #{vae_forward.1} parent=1 // pred_fallthru
      _
    // Predicated region
    $region18: #{vae_forward.1} parent=1 // pred_check
      _
    $region19: #{vae_forward.1} parent=1 // pred_check_branch
      %30 = sbr.rel (0) target = $region21
    $region20: #{vae_forward.1} parent=1 // pred_region
      _
    $region21: #{vae_forward.1} parent=1 // pred_fallthru
      _
    // Predicated region
    $region22: #{vae_forward.1} parent=1 // pred_check
      _
    $region23: #{vae_forward.1} parent=1 // pred_check_branch
      %32 = sbr.rel (0) target = $region25
    $region24: #{vae_forward.1} parent=1 // pred_region
      _
    $region25: #{vae_forward.1} parent=1 // pred_fallthru
      _
    // Predicated region
    $region26: #{vae_forward.1} parent=1 // pred_check
      _
    $region27: #{vae_forward.1} parent=1 // pred_check_branch
      %34 = sbr.rel (0) target = $region29
    $region28: #{vae_forward.1} parent=1 // pred_region
      _
    $region29: #{vae_forward.1} parent=1 // pred_fallthru
      _
    // Predicated region
    $region30: #{vae_forward.1} parent=1 // pred_check
      _
    $region31: #{vae_forward.1} parent=1 // pred_check_branch
      %36 = sbr.rel (0) target = $region33
    $region32: #{vae_forward.1} parent=1 // pred_region
      _
    $region33: #{vae_forward.1} parent=1 // pred_fallthru
      _
    // Predicated region
    $region34: #{vae_forward.1} parent=1 // pred_check
      _
    $region35: #{vae_forward.1} parent=1 // pred_check_branch
      %38 = sbr.rel (0) target = $region37
    $region36: #{vae_forward.1} parent=1 // pred_region
      %s40 = ssub.s32 2048, 2048
      %41 = vsyncadd [#allocation3], %s40
      %s42 = sshll.u32 [#allocation2], 4
      %s43 = int_to_ptr.vmem [resolvable:$true] %s42
      %48 = dma.hbm_to_vmem [thread:$0]  %s8, 2048, %s43, [#allocation3], 128, 128, 8
    $region37: #{vae_forward.1} parent=1 // pred_fallthru
      _
    // Predicated region
    $region38: #{vae_forward.1} parent=1 // pred_check
      _
    $region39: #{vae_forward.1} parent=1 // pred_check_branch
      %50 = sbr.rel (0) target = $region41
    $region40: #{vae_forward.1} parent=1 // pred_region
      _
    $region41: #{vae_forward.1} parent=1 // pred_fallthru
      _
    // Predicated region
    $region42: #{vae_forward.1} parent=1 // pred_check
      _
    $region43: #{vae_forward.1} parent=1 // pred_check_branch
      %52 = sbr.rel (0) target = $region45
    $region44: #{vae_forward.1} parent=1 // pred_region
      %53 = dma.done [#allocation3], 2048
    $region45: #{vae_forward.1} parent=1 // pred_fallthru
      _
    %v54 = vld [vmem:[%s0] sm:$0xff]
    %v55 = vld [vmem:[%s2] sm:$0xff]
    %v56 = vld [vmem:[%s2 + $0x8] sm:$0xff]
    %v57 = vld [vmem:[%s2 + $0x10] sm:$0xff]
    %v58 = vld [vmem:[%s2 + $0x18] sm:$0xff]
    %v59 = vld [vmem:[%s2 + $0x20] sm:$0xff]
    %v60 = vld [vmem:[%s2 + $0x28] sm:$0xff]
    %v61 = vld [vmem:[%s2 + $0x30] sm:$0xff]
    %v62 = vld [vmem:[%s2 + $0x38] sm:$0xff]
    %v63 = vld [vmem:[%s2 + $0x40] sm:$0xff]
    %v64 = vld [vmem:[%s2 + $0x48] sm:$0xff]
    %v65 = vld [vmem:[%s2 + $0x50] sm:$0xff]
    %v66 = vld [vmem:[%s2 + $0x58] sm:$0xff]
    %v67 = vld [vmem:[%s2 + $0x60] sm:$0xff]
    %v68 = vld [vmem:[%s2 + $0x68] sm:$0xff]
    %v69 = vld [vmem:[%s2 + $0x70] sm:$0xff]
    %v70 = vld [vmem:[%s2 + $0x78] sm:$0xff]
    %v71 = vld [vmem:[%s3] sm:$0x1]
    %v73 = vlaneseq
    %v74 = vshrl.u32 %v73, 7
    %v75 = vsub.s32 0, %v74
    %v76 = vrot.slane %v71, %v75
    %78 = vmatprep.subr.mxu0 0.0
    %79 = vmatpush1.msra.mxu0 %v55
    %80 = vmatprep.subr.mxu0 0.0
    %81 = vmatpush1.msra.mxu0 %v56
    %82 = vmatprep.subr.mxu0 0.0
    %83 = vmatpush1.msra.mxu0 %v57
    %84 = vmatprep.subr.mxu0 0.0
    %85 = vmatpush1.msra.mxu0 %v58
    %86 = vmatprep.subr.mxu0 0.0
    %87 = vmatpush1.msra.mxu0 %v59
    %88 = vmatprep.subr.mxu0 0.0
    %89 = vmatpush1.msra.mxu0 %v60
    %90 = vmatprep.subr.mxu0 0.0
    %91 = vmatpush1.msra.mxu0 %v61
    %92 = vmatprep.subr.mxu0 0.0
    %93 = vmatpush1.msra.mxu0 %v62
    %94 = vmatprep.subr.mxu0 0.0
    %95 = vmatpush1.msra.mxu0 %v63
    %96 = vmatprep.subr.mxu0 0.0
    %97 = vmatpush1.msra.mxu0 %v64
    %98 = vmatprep.subr.mxu0 0.0
    %99 = vmatpush1.msra.mxu0 %v65
    %100 = vmatprep.subr.mxu0 0.0
    %101 = vmatpush1.msra.mxu0 %v66
    %102 = vmatprep.subr.mxu0 0.0
    %103 = vmatpush1.msra.mxu0 %v67
    %104 = vmatprep.subr.mxu0 0.0
    %105 = vmatpush1.msra.mxu0 %v68
    %106 = vmatprep.subr.mxu0 0.0
    %107 = vmatpush1.msra.mxu0 %v69
    %108 = vmatprep.subr.mxu0 0.0
    %109 = vmatpush1.msra.mxu0 %v70
    %110 = vmatprep.subr.mxu0 0.0
    %111 = vmatpush1.msra.mxu0 0.0
    %112 = vmatprep.subr.mxu0 0.0
    %113 = vmatpush1.msra.mxu0 0.0
    %114 = vmatprep.subr.mxu0 0.0
    %115 = vmatpush1.msra.mxu0 0.0
    %116 = vmatprep.subr.mxu0 0.0
    %117 = vmatpush1.msra.mxu0 0.0
    %118 = vmatprep.subr.mxu0 0.0
    %119 = vmatpush1.msra.mxu0 0.0
    %120 = vmatprep.subr.mxu0 0.0
    %121 = vmatpush1.msra.mxu0 0.0
    %122 = vmatprep.subr.mxu0 0.0
    %123 = vmatpush1.msra.mxu0 0.0
    %124 = vmatprep.subr.mxu0 0.0
    %125 = vmatpush1.msra.mxu0 0.0
    %126 = vmatprep.subr.mxu0 0.0
    %127 = vmatpush1.msra.mxu0 0.0
    %128 = vmatprep.subr.mxu0 0.0
    %129 = vmatpush1.msra.mxu0 0.0
    %130 = vmatprep.subr.mxu0 0.0
    %131 = vmatpush1.msra.mxu0 0.0
    %132 = vmatprep.subr.mxu0 0.0
    %133 = vmatpush1.msra.mxu0 0.0
    %134 = vmatprep.subr.mxu0 0.0
    %135 = vmatpush1.msra.mxu0 0.0
    %136 = vmatprep.subr.mxu0 0.0
    %137 = vmatpush1.msra.mxu0 0.0
    %138 = vmatprep.subr.mxu0 0.0
    %139 = vmatpush1.msra.mxu0 0.0
    %140 = vmatprep.subr.mxu0 0.0
    %141 = vmatpush1.msra.mxu0 0.0
    %142 = vmatprep.mubr.f32.mxu0 0.0
    %143 = vmatmul.mubr.f32.gmra.mrb[0].mxu0 %v54
    %v144 = vpop.f32.mrb[0].mxu0
    %v145 = vadd.f32 %v76, %v144
    %v146 = vpop.f32.mrb[0].mxu0
    %147 = vdwg.mxu0
    %v148 = vmax.f32 %v145, 0.0
    %v149 = vld [vmem:[%s4] sm:$0xff]
    %v150 = vld [vmem:[%s4 + $0x8] sm:$0xff]
    %v151 = vld [vmem:[%s4 + $0x10] sm:$0xff]
    %v152 = vld [vmem:[%s4 + $0x18] sm:$0xff]
    %v153 = vld [vmem:[%s4 + $0x20] sm:$0xff]
    %v154 = vld [vmem:[%s4 + $0x28] sm:$0xff]
    %v155 = vld [vmem:[%s4 + $0x30] sm:$0xff]
    %v156 = vld [vmem:[%s4 + $0x38] sm:$0xff]
    %v157 = vld [vmem:[%s4 + $0x40] sm:$0xff]
    %v158 = vld [vmem:[%s4 + $0x48] sm:$0xff]
    %v159 = vld [vmem:[%s4 + $0x50] sm:$0xff]
    %v160 = vld [vmem:[%s4 + $0x58] sm:$0xff]
    %v161 = vld [vmem:[%s4 + $0x60] sm:$0xff]
    %v162 = vld [vmem:[%s4 + $0x68] sm:$0xff]
    %v163 = vld [vmem:[%s4 + $0x70] sm:$0xff]
    %v164 = vld [vmem:[%s4 + $0x78] sm:$0xff]
    %v165 = vld [vmem:[%s4 + $0x80] sm:$0xff]
    %v166 = vld [vmem:[%s4 + $0x88] sm:$0xff]
    %v167 = vld [vmem:[%s4 + $0x90] sm:$0xff]
    %v168 = vld [vmem:[%s4 + $0x98] sm:$0xff]
    %v169 = vld [vmem:[%s4 + $0xa0] sm:$0xff]
    %v170 = vld [vmem:[%s4 + $0xa8] sm:$0xff]
    %v171 = vld [vmem:[%s4 + $0xb0] sm:$0xff]
    %v172 = vld [vmem:[%s4 + $0xb8] sm:$0xff]
    %v173 = vld [vmem:[%s4 + $0xc0] sm:$0xff]
    %v174 = vld [vmem:[%s4 + $0xc8] sm:$0xff]
    %v175 = vld [vmem:[%s4 + $0xd0] sm:$0xff]
    %v176 = vld [vmem:[%s4 + $0xd8] sm:$0xff]
    %v177 = vld [vmem:[%s4 + $0xe0] sm:$0xff]
    %v178 = vld [vmem:[%s4 + $0xe8] sm:$0xff]
    %v179 = vld [vmem:[%s4 + $0xf0] sm:$0xff]
    %v180 = vld [vmem:[%s4 + $0xf8] sm:$0xff]
    %v181 = vld [vmem:[%s5] sm:$0x3]
    %v183 = vlaneseq
    %v184 = vshrl.u32 %v183, 7
    %v185 = vsub.s32 0, %v184
    %v186 = vrot.slane %v181, %v185
    %v187 = vlaneseq
    %v188 = vshrl.u32 %v187, 7
    %v189 = vsub.s32 1, %v188
    %v190 = vrot.slane %v181, %v189
    %193 = vmatprep.subr.mxu0 %v150
    %194 = vmatpush1.msra.mxu0 %v149
    %195 = vmatprep.subr.mxu0 %v152
    %196 = vmatpush1.msra.mxu0 %v151
    %197 = vmatprep.subr.mxu0 %v154
    %198 = vmatpush1.msra.mxu0 %v153
    %199 = vmatprep.subr.mxu0 %v156
    %200 = vmatpush1.msra.mxu0 %v155
    %201 = vmatprep.subr.mxu0 %v158
    %202 = vmatpush1.msra.mxu0 %v157
    %203 = vmatprep.subr.mxu0 %v160
    %204 = vmatpush1.msra.mxu0 %v159
    %205 = vmatprep.subr.mxu0 %v162
    %206 = vmatpush1.msra.mxu0 %v161
    %207 = vmatprep.subr.mxu0 %v164
    %208 = vmatpush1.msra.mxu0 %v163
    %209 = vmatprep.subr.mxu0 %v166
    %210 = vmatpush1.msra.mxu0 %v165
    %211 = vmatprep.subr.mxu0 %v168
    %212 = vmatpush1.msra.mxu0 %v167
    %213 = vmatprep.subr.mxu0 %v170
    %214 = vmatpush1.msra.mxu0 %v169
    %215 = vmatprep.subr.mxu0 %v172
    %216 = vmatpush1.msra.mxu0 %v171
    %217 = vmatprep.subr.mxu0 %v174
    %218 = vmatpush1.msra.mxu0 %v173
    %219 = vmatprep.subr.mxu0 %v176
    %220 = vmatpush1.msra.mxu0 %v175
    %221 = vmatprep.subr.mxu0 %v178
    %222 = vmatpush1.msra.mxu0 %v177
    %223 = vmatprep.subr.mxu0 %v180
    %224 = vmatpush1.msra.mxu0 %v179
    %225 = vmatprep.subr.mxu0 0.0
    %226 = vmatpush1.msra.mxu0 0.0
    %227 = vmatprep.subr.mxu0 0.0
    %228 = vmatpush1.msra.mxu0 0.0
    %229 = vmatprep.subr.mxu0 0.0
    %230 = vmatpush1.msra.mxu0 0.0
    %231 = vmatprep.subr.mxu0 0.0
    %232 = vmatpush1.msra.mxu0 0.0
    %233 = vmatprep.subr.mxu0 0.0
    %234 = vmatpush1.msra.mxu0 0.0
    %235 = vmatprep.subr.mxu0 0.0
    %236 = vmatpush1.msra.mxu0 0.0
    %237 = vmatprep.subr.mxu0 0.0
    %238 = vmatpush1.msra.mxu0 0.0
    %239 = vmatprep.subr.mxu0 0.0
    %240 = vmatpush1.msra.mxu0 0.0
    %241 = vmatprep.subr.mxu0 0.0
    %242 = vmatpush1.msra.mxu0 0.0
    %243 = vmatprep.subr.mxu0 0.0
    %244 = vmatpush1.msra.mxu0 0.0
    %245 = vmatprep.subr.mxu0 0.0
    %246 = vmatpush1.msra.mxu0 0.0
    %247 = vmatprep.subr.mxu0 0.0
    %248 = vmatpush1.msra.mxu0 0.0
    %249 = vmatprep.subr.mxu0 0.0
    %250 = vmatpush1.msra.mxu0 0.0
    %251 = vmatprep.subr.mxu0 0.0
    %252 = vmatpush1.msra.mxu0 0.0
    %253 = vmatprep.subr.mxu0 0.0
    %254 = vmatpush1.msra.mxu0 0.0
    %255 = vmatprep.subr.mxu0 0.0
    %256 = vmatpush1.msra.mxu0 0.0
    %257 = vmatprep.mubr.f32.mxu0 0.0
    %258 = vmatmul.mubr.f32.gmra.mrb[0].mxu0 %v148
    %v259 = vpop.f32.mrb[0].mxu0
    %v260 = vadd.f32 %v186, %v259
    %v261 = vpop.f32.mrb[0].mxu0
    %v262 = vadd.f32 %v190, %v261
    %263 = vdwg.mxu0
    %v264 = vmul.f32 %v262, 0.5
    %v265 = vmul.f32 %v264, 1.442695
    %v266 = vpow.pop %v265
    %v267 = vld [vmem:[%s1] sm:$0xff]
    %v268 = vmul.f32 %v267, %v266
    %v269 = vadd.f32 %v268, %v260
    %v270 = vld [vmem:[%s6] sm:$0xff]
    %v271 = vld [vmem:[%s6 + $0x8] sm:$0xff]
    %v272 = vld [vmem:[%s6 + $0x10] sm:$0xff]
    %v273 = vld [vmem:[%s6 + $0x18] sm:$0xff]
    %v274 = vld [vmem:[%s6 + $0x20] sm:$0xff]
    %v275 = vld [vmem:[%s6 + $0x28] sm:$0xff]
    %v276 = vld [vmem:[%s6 + $0x30] sm:$0xff]
    %v277 = vld [vmem:[%s6 + $0x38] sm:$0xff]
    %v278 = vld [vmem:[%s6 + $0x40] sm:$0xff]
    %v279 = vld [vmem:[%s6 + $0x48] sm:$0xff]
    %v280 = vld [vmem:[%s6 + $0x50] sm:$0xff]
    %v281 = vld [vmem:[%s6 + $0x58] sm:$0xff]
    %v282 = vld [vmem:[%s6 + $0x60] sm:$0xff]
    %v283 = vld [vmem:[%s6 + $0x68] sm:$0xff]
    %v284 = vld [vmem:[%s6 + $0x70] sm:$0xff]
    %v285 = vld [vmem:[%s6 + $0x78] sm:$0xff]
    %v286 = vld [vmem:[%s7] sm:$0x1]
    %v288 = vlaneseq
    %v289 = vshrl.u32 %v288, 7
    %v290 = vsub.s32 0, %v289
    %v291 = vrot.slane %v286, %v290
    %293 = vmatprep.subr.mxu0 0.0
    %294 = vmatpush1.msra.mxu0 %v270
    %295 = vmatprep.subr.mxu0 0.0
    %296 = vmatpush1.msra.mxu0 %v271
    %297 = vmatprep.subr.mxu0 0.0
    %298 = vmatpush1.msra.mxu0 %v272
    %299 = vmatprep.subr.mxu0 0.0
    %300 = vmatpush1.msra.mxu0 %v273
    %301 = vmatprep.subr.mxu0 0.0
    %302 = vmatpush1.msra.mxu0 %v274
    %303 = vmatprep.subr.mxu0 0.0
    %304 = vmatpush1.msra.mxu0 %v275
    %305 = vmatprep.subr.mxu0 0.0
    %306 = vmatpush1.msra.mxu0 %v276
    %307 = vmatprep.subr.mxu0 0.0
    %308 = vmatpush1.msra.mxu0 %v277
    %309 = vmatprep.subr.mxu0 0.0
    %310 = vmatpush1.msra.mxu0 %v278
    %311 = vmatprep.subr.mxu0 0.0
    %312 = vmatpush1.msra.mxu0 %v279
    %313 = vmatprep.subr.mxu0 0.0
    %314 = vmatpush1.msra.mxu0 %v280
    %315 = vmatprep.subr.mxu0 0.0
    %316 = vmatpush1.msra.mxu0 %v281
    %317 = vmatprep.subr.mxu0 0.0
    %318 = vmatpush1.msra.mxu0 %v282
    %319 = vmatprep.subr.mxu0 0.0
    %320 = vmatpush1.msra.mxu0 %v283
    %321 = vmatprep.subr.mxu0 0.0
    %322 = vmatpush1.msra.mxu0 %v284
    %323 = vmatprep.subr.mxu0 0.0
    %324 = vmatpush1.msra.mxu0 %v285
    %325 = vmatprep.subr.mxu0 0.0
    %326 = vmatpush1.msra.mxu0 0.0
    %327 = vmatprep.subr.mxu0 0.0
    %328 = vmatpush1.msra.mxu0 0.0
    %329 = vmatprep.subr.mxu0 0.0
    %330 = vmatpush1.msra.mxu0 0.0
    %331 = vmatprep.subr.mxu0 0.0
    %332 = vmatpush1.msra.mxu0 0.0
    %333 = vmatprep.subr.mxu0 0.0
    %334 = vmatpush1.msra.mxu0 0.0
    %335 = vmatprep.subr.mxu0 0.0
    %336 = vmatpush1.msra.mxu0 0.0
    %337 = vmatprep.subr.mxu0 0.0
    %338 = vmatpush1.msra.mxu0 0.0
    %339 = vmatprep.subr.mxu0 0.0
    %340 = vmatpush1.msra.mxu0 0.0
    %341 = vmatprep.subr.mxu0 0.0
    %342 = vmatpush1.msra.mxu0 0.0
    %343 = vmatprep.subr.mxu0 0.0
    %344 = vmatpush1.msra.mxu0 0.0
    %345 = vmatprep.subr.mxu0 0.0
    %346 = vmatpush1.msra.mxu0 0.0
    %347 = vmatprep.subr.mxu0 0.0
    %348 = vmatpush1.msra.mxu0 0.0
    %349 = vmatprep.subr.mxu0 0.0
    %350 = vmatpush1.msra.mxu0 0.0
    %351 = vmatprep.subr.mxu0 0.0
    %352 = vmatpush1.msra.mxu0 0.0
    %353 = vmatprep.subr.mxu0 0.0
    %354 = vmatpush1.msra.mxu0 0.0
    %355 = vmatprep.subr.mxu0 0.0
    %356 = vmatpush1.msra.mxu0 0.0
    %357 = vmatprep.mubr.f32.mxu0 0.0
    %358 = vmatmul.mubr.f32.gmra.mrb[0].mxu0 %v269
    %v359 = vpop.f32.mrb[0].mxu0
    %v360 = vadd.f32 %v291, %v359
    %v361 = vpop.f32.mrb[0].mxu0
    %362 = vdwg.mxu0
    %v363 = vmax.f32 %v360, 0.0
    %v364 = vld [vmem:[#allocation2] sm:$0xff]
    %v365 = vld [vmem:[#allocation2 + $0x8] sm:$0xff]
    %v366 = vld [vmem:[#allocation2 + $0x10] sm:$0xff]
    %v367 = vld [vmem:[#allocation2 + $0x18] sm:$0xff]
    %v368 = vld [vmem:[#allocation2 + $0x20] sm:$0xff]
    %v369 = vld [vmem:[#allocation2 + $0x28] sm:$0xff]
    %v370 = vld [vmem:[#allocation2 + $0x30] sm:$0xff]
    %v371 = vld [vmem:[#allocation2 + $0x38] sm:$0xff]
    %v372 = vld [vmem:[#allocation2 + $0x40] sm:$0xff]
    %v373 = vld [vmem:[#allocation2 + $0x48] sm:$0xff]
    %v374 = vld [vmem:[#allocation2 + $0x50] sm:$0xff]
    %v375 = vld [vmem:[#allocation2 + $0x58] sm:$0xff]
    %v376 = vld [vmem:[#allocation2 + $0x60] sm:$0xff]
    %v377 = vld [vmem:[#allocation2 + $0x68] sm:$0xff]
    %v378 = vld [vmem:[#allocation2 + $0x70] sm:$0xff]
    %v379 = vld [vmem:[#allocation2 + $0x78] sm:$0xff]
    %v380 = vld [vmem:[%s9] sm:$0x1]
    %v382 = vlaneseq
    %v383 = vshrl.u32 %v382, 7
    %v384 = vsub.s32 0, %v383
    %v385 = vrot.slane %v380, %v384
    %387 = vmatprep.subr.mxu0 0.0
    %388 = vmatpush1.msra.mxu0 %v364
    %389 = vmatprep.subr.mxu0 0.0
    %390 = vmatpush1.msra.mxu0 %v365
    %391 = vmatprep.subr.mxu0 0.0
    %392 = vmatpush1.msra.mxu0 %v366
    %393 = vmatprep.subr.mxu0 0.0
    %394 = vmatpush1.msra.mxu0 %v367
    %395 = vmatprep.subr.mxu0 0.0
    %396 = vmatpush1.msra.mxu0 %v368
    %397 = vmatprep.subr.mxu0 0.0
    %398 = vmatpush1.msra.mxu0 %v369
    %399 = vmatprep.subr.mxu0 0.0
    %400 = vmatpush1.msra.mxu0 %v370
    %401 = vmatprep.subr.mxu0 0.0
    %402 = vmatpush1.msra.mxu0 %v371
    %403 = vmatprep.subr.mxu0 0.0
    %404 = vmatpush1.msra.mxu0 %v372
    %405 = vmatprep.subr.mxu0 0.0
    %406 = vmatpush1.msra.mxu0 %v373
    %407 = vmatprep.subr.mxu0 0.0
    %408 = vmatpush1.msra.mxu0 %v374
    %409 = vmatprep.subr.mxu0 0.0
    %410 = vmatpush1.msra.mxu0 %v375
    %411 = vmatprep.subr.mxu0 0.0
    %412 = vmatpush1.msra.mxu0 %v376
    %413 = vmatprep.subr.mxu0 0.0
    %414 = vmatpush1.msra.mxu0 %v377
    %415 = vmatprep.subr.mxu0 0.0
    %416 = vmatpush1.msra.mxu0 %v378
    %417 = vmatprep.subr.mxu0 0.0
    %418 = vmatpush1.msra.mxu0 %v379
    %419 = vmatprep.subr.mxu0 0.0
    %420 = vmatpush1.msra.mxu0 0.0
    %421 = vmatprep.subr.mxu0 0.0
    %422 = vmatpush1.msra.mxu0 0.0
    %423 = vmatprep.subr.mxu0 0.0
    %424 = vmatpush1.msra.mxu0 0.0
    %425 = vmatprep.subr.mxu0 0.0
    %426 = vmatpush1.msra.mxu0 0.0
    %427 = vmatprep.subr.mxu0 0.0
    %428 = vmatpush1.msra.mxu0 0.0
    %429 = vmatprep.subr.mxu0 0.0
    %430 = vmatpush1.msra.mxu0 0.0
    %431 = vmatprep.subr.mxu0 0.0
    %432 = vmatpush1.msra.mxu0 0.0
    %433 = vmatprep.subr.mxu0 0.0
    %434 = vmatpush1.msra.mxu0 0.0
    %435 = vmatprep.subr.mxu0 0.0
    %436 = vmatpush1.msra.mxu0 0.0
    %437 = vmatprep.subr.mxu0 0.0
    %438 = vmatpush1.msra.mxu0 0.0
    %439 = vmatprep.subr.mxu0 0.0
    %440 = vmatpush1.msra.mxu0 0.0
    %441 = vmatprep.subr.mxu0 0.0
    %442 = vmatpush1.msra.mxu0 0.0
    %443 = vmatprep.subr.mxu0 0.0
    %444 = vmatpush1.msra.mxu0 0.0
    %445 = vmatprep.subr.mxu0 0.0
    %446 = vmatpush1.msra.mxu0 0.0
    %447 = vmatprep.subr.mxu0 0.0
    %448 = vmatpush1.msra.mxu0 0.0
    %449 = vmatprep.subr.mxu0 0.0
    %450 = vmatpush1.msra.mxu0 0.0
    %451 = vmatprep.mubr.f32.mxu0 0.0
    %452 = vmatmul.mubr.f32.gmra.mrb[0].mxu0 %v363
    %v453 = vpop.f32.mrb[0].mxu0
    %v454 = vadd.f32 %v385, %v453
    %v455 = vpop.f32.mrb[0].mxu0
    %456 = vdwg.mxu0
    %v457 = vxor.u32 %v454, 2147483648
    %v458 = vmul.f32 %v457, 1.442695
    %v459 = vpow.pop %v458
    %v460 = vadd.f32 %v459, 1.0
    %v461 = vrcp.pop %v460
    %v462 = vmul.f32 1.0, %v461
    %463 = vst [vmem:[#allocation5] sm:$0xff] %v462
    %464 = vst [vmem:[#allocation6] sm:$0xff] %v260
    %465 = vst [vmem:[#allocation8] sm:$0xff] %v262
    // Predicated region
    $region46: #{vae_forward.1} parent=1 // pred_check
      _
    $region47: #{vae_forward.1} parent=1 // pred_check_branch
      %467 = sbr.rel (0) target = $region49
    $region48: #{vae_forward.1} parent=1 // pred_region
      %s469 = ssub.s32 128, 128
      %470 = vsyncadd [#allocation4], %s469
      %s472 = sshll.u32 [#allocation5], 4
      %s473 = int_to_ptr.vmem [resolvable:$true] %s472
      %475 = dma.vmem_to_hbm [thread:$0]  %s473, 128, %s10, [#allocation4]
    $region49: #{vae_forward.1} parent=1 // pred_fallthru
      _
    // Predicated region
    $region50: #{vae_forward.1} parent=1 // pred_check
      _
    $region51: #{vae_forward.1} parent=1 // pred_check_branch
      %477 = sbr.rel (0) target = $region53
    $region52: #{vae_forward.1} parent=1 // pred_region
      %s479 = ssub.s32 128, 128
      %480 = vsyncadd [#allocation7], %s479
      %s482 = sshll.u32 [#allocation6], 4
      %s483 = int_to_ptr.vmem [resolvable:$true] %s482
      %485 = dma.vmem_to_hbm [thread:$0]  %s483, 128, %s11, [#allocation7]
    $region53: #{vae_forward.1} parent=1 // pred_fallthru
      _
    // Predicated region
    $region54: #{vae_forward.1} parent=1 // pred_check
      _
    $region55: #{vae_forward.1} parent=1 // pred_check_branch
      %487 = sbr.rel (0) target = $region57
    $region56: #{vae_forward.1} parent=1 // pred_region
      %s489 = ssub.s32 128, 128
      %490 = vsyncadd [#allocation7], %s489
      %s492 = sshll.u32 [#allocation8], 4
      %s493 = int_to_ptr.vmem [resolvable:$true] %s492
      %495 = dma.vmem_to_hbm [thread:$0]  %s493, 128, %s12, [#allocation7]
    $region57: #{vae_forward.1} parent=1 // pred_fallthru
      _
    // Predicated region
    $region58: #{vae_forward.1} parent=1 // pred_check
      _
    $region59: #{vae_forward.1} parent=1 // pred_check_branch
      %497 = sbr.rel (0) target = $region61
    $region60: #{vae_forward.1} parent=1 // pred_region
      %498 = dma.done [#allocation4], 128
    $region61: #{vae_forward.1} parent=1 // pred_fallthru
      _
    // Predicated region
    $region62: #{vae_forward.1} parent=1 // pred_check
      _
    $region63: #{vae_forward.1} parent=1 // pred_check_branch
      %500 = sbr.rel (0) target = $region65
    $region64: #{vae_forward.1} parent=1 // pred_region
      %501 = dma.done [#allocation7], 128
    $region65: #{vae_forward.1} parent=1 // pred_fallthru
      _
    // Predicated region
    $region66: #{vae_forward.1} parent=1 // pred_check
      _
    $region67: #{vae_forward.1} parent=1 // pred_check_branch
      %503 = sbr.rel (0) target = $region69
    $region68: #{vae_forward.1} parent=1 // pred_region
      %504 = dma.done [#allocation7], 128
    $region69: #{vae_forward.1} parent=1 // pred_fallthru
      _
    %505 = vsyncpa [#allocation3], 1
    %506 = vsyncpa [#allocation4], 1
    %507 = vsyncpa [#allocation7], 1

</llo_original>
